<compile_context>
chip_gen: v5e
topology: v5e:2x2
jax: 0.10.0
libtpu: 0.0.40
codegen_flags: <defaults>
</compile_context>

<pallas_src>
import functools

import jax
import jax.numpy as jnp
from jax.experimental import pallas as pl
from jax.experimental.pallas import tpu as pltpu


def _round_up(x, m):
    return (x + m - 1) // m * m


# ---------------------------------------------------------------------------
# In-kernel helpers
# ---------------------------------------------------------------------------
def _causal_taps(x, zpad, kernel_size, dilation, padding):
    """Build the (K*C, L) stacked-taps operand of a dilated causal conv.

    x: (C, L) f32; zpad: (C, padding) zeros (hoisted, built once per grid step).
    Column t of tap k holds x[:, t + k*dilation - padding] (zero for negative
    time), i.e. conv1d(pad=padding) followed by Chomp1d(padding) with only the
    first L outputs ever produced (chomp fused, no extra HBM pass).
    """
    L = x.shape[-1]
    xp = jnp.concatenate([zpad, x], axis=-1) if padding > 0 else x   # (C, pad+L)
    slabs = [xp[:, k * dilation:k * dilation + L] for k in range(kernel_size)]
    if kernel_size == 1:
        return slabs[0]
    return jnp.concatenate(slabs, axis=0)                            # (K*C, L)


def _temporal_block_kernel(*refs, kernel_size, dilation, padding, has_downsample,
                           batch_block, c_out_store, compute_dtype):
    if has_downsample:
        x_ref, w1_ref, b1_ref, w2_ref, b2_ref, wd_ref, bd_ref, o_ref = refs
    else:
        x_ref, w1_ref, b1_ref, w2_ref, b2_ref, o_ref = refs

    c_in_p = x_ref.shape[1]
    c_out_p = b1_ref.shape[0]

    # Weights/biases stay VMEM resident across the grid (constant index_maps).
    w1 = w1_ref[...]                       # (c_out_p, K*c_in_p)  compute_dtype
    w2 = w2_ref[...]                       # (c_out_p, K*c_out_p) compute_dtype
    b1 = b1_ref[...]                       # (c_out_p, 1) f32
    b2 = b2_ref[...]
    if has_downsample:
        wd = wd_ref[...]                   # (c_out_p, c_in_p) compute_dtype
        bd = bd_ref[...]

    # Hoisted zero slabs (JAX does not CSE broadcasts; build once per grid step,
    # not per tap / per batch element).
    zpad_in = jnp.zeros((c_in_p, padding), jnp.float32) if padding > 0 else None
    zpad_h = jnp.zeros((c_out_p, padding), jnp.float32) if padding > 0 else None

    for b in range(batch_block):                        # static, small
        x = x_ref[b].astype(jnp.float32)                # (c_in_p, L)

        # conv1 + chomp + relu: single MXU matmul, contraction dim = K*c_in_p.
        taps = _causal_taps(x, zpad_in, kernel_size, dilation, padding)
        h = jnp.dot(w1, taps.astype(compute_dtype),
                    preferred_element_type=jnp.float32) + b1
        h = jnp.maximum(h, 0.0)

        # conv2 + chomp + relu.
        taps = _causal_taps(h, zpad_h, kernel_size, dilation, padding)
        h = jnp.dot(w2, taps.astype(compute_dtype),
                    preferred_element_type=jnp.float32) + b2
        h = jnp.maximum(h, 0.0)

        if has_downsample:
            res = jnp.dot(wd, x.astype(compute_dtype),
                          preferred_element_type=jnp.float32) + bd
        else:
            res = x                                     # c_in(_p) == c_out(_p)

        out = jnp.maximum(h + res, 0.0)                 # f32 epilogue (v5e-safe)
        if out.shape[0] != c_out_store:
            out = out[:c_out_store]
        o_ref[b] = out.astype(o_ref.dtype)


# ---------------------------------------------------------------------------
# Wrapper
# ---------------------------------------------------------------------------
def _apply_weight_norm(v, g):
    """PyTorch weight_norm (dim=0): w = g * v / ||v||, norm over all dims but 0."""
    norm = jnp.sqrt(jnp.sum(v * v, axis=tuple(range(1, v.ndim)), keepdims=True))
    g = g.reshape((v.shape[0],) + (1,) * (v.ndim - 1))
    return g * v / norm


def _const_spec(shape):
    n = len(shape)
    return pl.BlockSpec(shape, lambda i, _n=n: (0,) * _n)


def _pick_batch_block(n, c_in_p, c_out_p, L_pad, kernel_size,
                      vmem_budget_bytes=6 * 1024 * 1024):
    """Largest per-step batch tile that (a) fits a conservative VMEM budget,
    (b) leaves >=2 grid steps when possible (feed both v7x TensorCores), and
    (c) divides N exactly."""
    per_elem = 4 * L_pad * (
        2 * c_in_p                              # x block (double-buffered)
        + 2 * c_out_p                           # out block (double-buffered)
        + kernel_size * (c_in_p + c_out_p)      # stacked-taps operands
        + 4 * c_out_p)                          # h1 / h2 / res / padded copies
    b = max(1, int(vmem_budget_bytes // max(per_elem, 1)))
    if n >= 2:
        b = min(b, n // 2)
    b = max(1, min(b, n))
    while n % b:
        b -= 1
    return b


def temporal_block(x, params, *, kernel_size, stride, dilation, padding,
                   compute_dtype=jnp.float32):
    """Pallas forward of TemporalBlock. x: (N, C_in, L) -> (N, C_out, L)."""
    assert stride == 1, "TCN TemporalBlock uses stride=1"
    # Residual add requires chomp(conv) to preserve L, i.e. padding == (K-1)*dilation.
    assert padding == (kernel_size - 1) * dilation

    n, c_in, L = x.shape
    K = kernel_size
    w1 = _apply_weight_norm(params["conv1_v"], params["conv1_g"])   # (c_out, c_in, K)
    w2 = _apply_weight_norm(params["conv2_v"], params["conv2_g"])   # (c_out, c_out, K)
    c_out = w1.shape[0]
    has_downsample = (c_in != c_out)
    if not has_downsample:
        assert c_in == c_out, "identity residual requires c_in == c_out"

    # Pad channels to f32 sublane multiples (8) and L to a lane multiple (128) so
    # every vreg / matmul tile / output store is dense.  Single combined pad of x,
    # no-op when already aligned (the weight-side pads are negligible).
    c_in_p = _round_up(c_in, 8)
    c_out_p = _round_up(c_out, 8)
    L_pad = _round_up(L, 128)
    if (c_in_p, L_pad) != (c_in, L):
        x_in = jnp.pad(x, ((0, 0), (0, c_in_p - c_in), (0, L_pad - L)))
    else:
        x_in = x

    def _flat_weight(w, cin_pad):
        # (c_out, c_in, K) -> zero-pad -> (c_out_p, K*cin_pad), tap-major so it
        # matches the stacked-taps operand built in the kernel.
        w = jnp.pad(w, ((0, c_out_p - w.shape[0]),
                        (0, cin_pad - w.shape[1]), (0, 0)))
        return (jnp.transpose(w, (0, 2, 1))
                .reshape(c_out_p, K * cin_pad).astype(compute_dtype))

    w1_f = _flat_weight(w1, c_in_p)
    w2_f = _flat_weight(w2, c_out_p)
    b1 = jnp.pad(params["conv1_b"], (0, c_out_p - c_out)).reshape(c_out_p, 1)
    b2 = jnp.pad(params["conv2_b"], (0, c_out_p - c_out)).reshape(c_out_p, 1)
    b1 = b1.astype(jnp.float32)
    b2 = b2.astype(jnp.float32)

    batch_block = _pick_batch_block(n, c_in_p, c_out_p, L_pad, K)

    kernel = functools.partial(
        _temporal_block_kernel,
        kernel_size=K, dilation=dilation, padding=padding,
        has_downsample=has_downsample, batch_block=batch_block,
        c_out_store=c_out, compute_dtype=compute_dtype)

    in_specs = [
        pl.BlockSpec((batch_block, c_in_p, L_pad), lambda i: (i, 0, 0)),  # x tile
        _const_spec(w1_f.shape),                                          # w1 (resident)
        _const_spec(b1.shape),                                            # b1
        _const_spec(w2_f.shape),                                          # w2
        _const_spec(b2.shape),                                            # b2
    ]
    args = [x_in, w1_f, b1, w2_f, b2]
    if has_downsample:
        wd = jnp.pad(params["down_w"][:, :, 0],
                     ((0, c_out_p - c_out), (0, c_in_p - c_in))).astype(compute_dtype)
        bd = jnp.pad(params["down_b"], (0, c_out_p - c_out)).reshape(c_out_p, 1)
        bd = bd.astype(jnp.float32)
        in_specs += [_const_spec(wd.shape), _const_spec(bd.shape)]
        args += [wd, bd]

    # VMEM limit from the tile estimate; never below the smallest default scoped
    # limit (16 MiB, v5e) and capped below v7x's 64 MiB per-TC VMEM.
    weight_bytes = sum(int(a.size) * a.dtype.itemsize for a in args[1:])
    tile_bytes = 4 * batch_block * L_pad * (
        2 * c_in_p + 2 * c_out_p + K * (c_in_p + c_out_p) + 4 * c_out_p)
    vmem_limit = int(min(48 * 2 ** 20,
                         max(16 * 2 ** 20, 2 * (weight_bytes + tile_bytes))))

    out = pl.pallas_call(
        kernel,
        out_shape=jax.ShapeDtypeStruct((n, c_out, L_pad), x.dtype),
        grid_spec=pltpu.PrefetchScalarGridSpec(
            num_scalar_prefetch=0,
            grid=(n // batch_block,),
            in_specs=in_specs,
            out_specs=pl.BlockSpec((batch_block, c_out, L_pad),
                                   lambda i: (i, 0, 0)),
        ),
        compiler_params=pltpu.CompilerParams(
            dimension_semantics=("parallel",),
            vmem_limit_bytes=vmem_limit,
        ),
    )(*args)

    if L_pad != L:
        out = out[:, :, :L]
    return out


# ---------------------------------------------------------------------------
# Pure-JAX reference (same math as PyTorch TemporalBlock in eval mode)
# ---------------------------------------------------------------------------
def _ref_causal_conv(x, w, b, dilation, padding):
    N, c_in, L = x.shape
    c_out, _, K = w.shape
    xp = jnp.pad(x, ((0, 0), (0, 0), (padding, 0)))
    out = jnp.zeros((N, c_out, L), jnp.float32)
    for k in range(K):
        out = out + jnp.einsum("oi,nil->nol", w[:, :, k],
                               xp[:, :, k * dilation: k * dilation + L])
    return out + b[None, :, None]


def _ref_temporal_block(x, params, *, kernel_size, dilation, padding):
    w1 = _apply_weight_norm(params["conv1_v"], params["conv1_g"])
    w2 = _apply_weight_norm(params["conv2_v"], params["conv2_g"])
    h = jax.nn.relu(_ref_causal_conv(x, w1, params["conv1_b"], dilation, padding))
    h = jax.nn.relu(_ref_causal_conv(h, w2, params["conv2_b"], dilation, padding))
    c_in, c_out = x.shape[1], w1.shape[0]
    if c_in != c_out:
        res = (jnp.einsum("oi,nil->nol", params["down_w"][:, :, 0], x)
               + params["down_b"][None, :, None])
    else:
        res = x
    return jax.nn.relu(h + res)


# ---------------------------------------------------------------------------
if __name__ == "__main__":
    key = jax.random.PRNGKey(0)
    N, C_IN, C_OUT, L = 4, 4, 8, 128          # L multiple of 128 -> lane-dense stores
    K, STRIDE, DILATION = 3, 1, 2
    PADDING = (K - 1) * DILATION              # == chomp size in the PyTorch module
    DROPOUT = 0.2                             # identity at inference

    ks = jax.random.split(key, 9)
    params = {
        "conv1_v": 0.01 * jax.random.normal(ks[0], (C_OUT, C_IN, K), jnp.float32),
        "conv1_g": jnp.abs(jax.random.normal(ks[1], (C_OUT,), jnp.float32)) + 0.5,
        "conv1_b": 0.1 * jax.random.normal(ks[2], (C_OUT,), jnp.float32),
        "conv2_v": 0.01 * jax.random.normal(ks[3], (C_OUT, C_OUT, K), jnp.float32),
        "conv2_g": jnp.abs(jax.random.normal(ks[4], (C_OUT,), jnp.float32)) + 0.5,
        "conv2_b": 0.1 * jax.random.normal(ks[5], (C_OUT,), jnp.float32),
        "down_w": 0.01 * jax.random.normal(ks[6], (C_OUT, C_IN, 1), jnp.float32),
        "down_b": 0.1 * jax.random.normal(ks[7], (C_OUT,), jnp.float32),
    }
    x = jax.random.normal(ks[8], (N, C_IN, L), dtype=jnp.float32)

    ref = _ref_temporal_block(x, params, kernel_size=K,
                              dilation=DILATION, padding=PADDING)

    # f32 operands (tight tolerance).
    out = temporal_block(x, params, kernel_size=K, stride=STRIDE,
                         dilation=DILATION, padding=PADDING)
    out = jax.block_until_ready(out)
    assert out.shape == (N, C_OUT, L), out.shape
    assert out.dtype == x.dtype
    max_err = float(jnp.max(jnp.abs(out - ref)))
    assert jnp.allclose(out, ref, atol=1e-5, rtol=1e-5), f"f32 max abs err {max_err}"

    # bf16 matmul operands (v6e/v7x MXU fast path; f32 accumulate + epilogue).
    out_bf16 = temporal_block(x, params, kernel_size=K, stride=STRIDE,
                              dilation=DILATION, padding=PADDING,
                              compute_dtype=jnp.bfloat16)
    out_bf16 = jax.block_until_ready(out_bf16)
    rel = float(jnp.linalg.norm(out_bf16 - ref) / jnp.linalg.norm(ref))
    assert rel < 1e-2, f"bf16 relative error {rel}"

    print("KERNEL_OK")
</pallas_src>

<mosaic_0001>
module attributes {stable_mosaic.version = 11 : i64} {
  func.func @_temporal_block_kernel(%arg0: i32, %arg1: memref<2x8x128xf32, #tpu.memory_space<vmem>>, %arg2: memref<8x24xf32, #tpu.memory_space<vmem>>, %arg3: memref<8x1xf32, #tpu.memory_space<vmem>>, %arg4: memref<8x24xf32, #tpu.memory_space<vmem>>, %arg5: memref<8x1xf32, #tpu.memory_space<vmem>>, %arg6: memref<8x8xf32, #tpu.memory_space<vmem>>, %arg7: memref<8x1xf32, #tpu.memory_space<vmem>>, %arg8: memref<2x8x128xf32, #tpu.memory_space<vmem>>) attributes {dimension_semantics = [#tpu.dimension_semantics<parallel>], iteration_bounds = array<i64: 2>, scalar_prefetch = 0 : i64, scratch_operands = 0 : i64, tpu.core_type = #tpu.core_type<tc>, window_params = [{transform_indices = @transform_0, window_bounds = array<i64: 2, 8, 128>}, {pipeline_mode = #tpu.pipeline_mode<synchronous>, transform_indices = @transform_1, window_bounds = array<i64: 8, 24>}, {pipeline_mode = #tpu.pipeline_mode<synchronous>, transform_indices = @transform_2, window_bounds = array<i64: 8, 1>}, {pipeline_mode = #tpu.pipeline_mode<synchronous>, transform_indices = @transform_3, window_bounds = array<i64: 8, 24>}, {pipeline_mode = #tpu.pipeline_mode<synchronous>, transform_indices = @transform_4, window_bounds = array<i64: 8, 1>}, {pipeline_mode = #tpu.pipeline_mode<synchronous>, transform_indices = @transform_5, window_bounds = array<i64: 8, 8>}, {pipeline_mode = #tpu.pipeline_mode<synchronous>, transform_indices = @transform_6, window_bounds = array<i64: 8, 1>}, {transform_indices = @transform_7, window_bounds = array<i64: 2, 8, 128>}]} {
    %c0 = arith.constant 0 : index
    %c0_0 = arith.constant 0 : index
    %0 = vector.load %arg2[%c0, %c0_0] : memref<8x24xf32, #tpu.memory_space<vmem>>, vector<8x24xf32>
    %c0_1 = arith.constant 0 : index
    %c0_2 = arith.constant 0 : index
    %1 = vector.load %arg4[%c0_1, %c0_2] : memref<8x24xf32, #tpu.memory_space<vmem>>, vector<8x24xf32>
    %c0_3 = arith.constant 0 : index
    %c0_4 = arith.constant 0 : index
    %2 = vector.load %arg3[%c0_3, %c0_4] : memref<8x1xf32, #tpu.memory_space<vmem>>, vector<8x1xf32>
    %c0_5 = arith.constant 0 : index
    %c0_6 = arith.constant 0 : index
    %3 = vector.load %arg5[%c0_5, %c0_6] : memref<8x1xf32, #tpu.memory_space<vmem>>, vector<8x1xf32>
    %c0_7 = arith.constant 0 : index
    %c0_8 = arith.constant 0 : index
    %4 = vector.load %arg6[%c0_7, %c0_8] : memref<8x8xf32, #tpu.memory_space<vmem>>, vector<8x8xf32>
    %c0_9 = arith.constant 0 : index
    %c0_10 = arith.constant 0 : index
    %5 = vector.load %arg7[%c0_9, %c0_10] : memref<8x1xf32, #tpu.memory_space<vmem>>, vector<8x1xf32>
    %cst = arith.constant 0.000000e+00 : f32
    %6 = vector.broadcast %cst : f32 to vector<8x4xf32>
    %cst_11 = arith.constant 0.000000e+00 : f32
    %7 = vector.broadcast %cst_11 : f32 to vector<8x4xf32>
    %c0_12 = arith.constant 0 : index
    %c0_13 = arith.constant 0 : index
    %c0_14 = arith.constant 0 : index
    %8 = vector.load %arg1[%c0_12, %c0_13, %c0_14] : memref<2x8x128xf32, #tpu.memory_space<vmem>>, vector<1x8x128xf32>
    %9 = vector.shape_cast %8 : vector<1x8x128xf32> to vector<8x128xf32>
    %10 = tpu.concatenate %6, %9 in 1 : vector<8x4xf32>, vector<8x128xf32> -> vector<8x132xf32>
    %11 = vector.extract_strided_slice %10 {offsets = [0, 0], sizes = [8, 128], strides = [1, 1]} : vector<8x132xf32> to vector<8x128xf32>
    %12 = vector.extract_strided_slice %10 {offsets = [0, 2], sizes = [8, 128], strides = [1, 1]} : vector<8x132xf32> to vector<8x128xf32>
    %13 = vector.extract_strided_slice %10 {offsets = [0, 4], sizes = [8, 128], strides = [1, 1]} : vector<8x132xf32> to vector<8x128xf32>
    %14 = tpu.concatenate %11, %12, %13 in 0 : vector<8x128xf32>, vector<8x128xf32>, vector<8x128xf32> -> vector<24x128xf32>
    %cst_15 = arith.constant dense<0.000000e+00> : vector<8x128xf32>
    %15 = tpu.matmul %0, %14, %cst_15 {dimension_numbers = #tpu.dot_dimension_numbers<[1], [0], [0], [1], [0, 0, 1, 1], [], []>} : vector<8x24xf32>, vector<24x128xf32>, vector<8x128xf32> -> vector<8x128xf32>
    %16 = vector.broadcast %2 : vector<8x1xf32> to vector<8x128xf32>
    %17 = arith.addf %15, %16 : vector<8x128xf32>
    %cst_16 = arith.constant 0.000000e+00 : f32
    %18 = vector.broadcast %cst_16 : f32 to vector<8x128xf32>
    %19 = arith.maximumf %17, %18 : vector<8x128xf32>
    %20 = tpu.concatenate %7, %19 in 1 : vector<8x4xf32>, vector<8x128xf32> -> vector<8x132xf32>
    %21 = vector.extract_strided_slice %20 {offsets = [0, 0], sizes = [8, 128], strides = [1, 1]} : vector<8x132xf32> to vector<8x128xf32>
    %22 = vector.extract_strided_slice %20 {offsets = [0, 2], sizes = [8, 128], strides = [1, 1]} : vector<8x132xf32> to vector<8x128xf32>
    %23 = vector.extract_strided_slice %20 {offsets = [0, 4], sizes = [8, 128], strides = [1, 1]} : vector<8x132xf32> to vector<8x128xf32>
    %24 = tpu.concatenate %21, %22, %23 in 0 : vector<8x128xf32>, vector<8x128xf32>, vector<8x128xf32> -> vector<24x128xf32>
    %cst_17 = arith.constant dense<0.000000e+00> : vector<8x128xf32>
    %25 = tpu.matmul %1, %24, %cst_17 {dimension_numbers = #tpu.dot_dimension_numbers<[1], [0], [0], [1], [0, 0, 1, 1], [], []>} : vector<8x24xf32>, vector<24x128xf32>, vector<8x128xf32> -> vector<8x128xf32>
    %26 = vector.broadcast %3 : vector<8x1xf32> to vector<8x128xf32>
    %27 = arith.addf %25, %26 : vector<8x128xf32>
    %cst_18 = arith.constant 0.000000e+00 : f32
    %28 = vector.broadcast %cst_18 : f32 to vector<8x128xf32>
    %29 = arith.maximumf %27, %28 : vector<8x128xf32>
    %cst_19 = arith.constant dense<0.000000e+00> : vector<8x128xf32>
    %30 = tpu.matmul %4, %9, %cst_19 {dimension_numbers = #tpu.dot_dimension_numbers<[1], [0], [0], [1], [0, 0, 1, 1], [], []>} : vector<8x8xf32>, vector<8x128xf32>, vector<8x128xf32> -> vector<8x128xf32>
    %31 = vector.broadcast %5 : vector<8x1xf32> to vector<8x128xf32>
    %32 = arith.addf %30, %31 : vector<8x128xf32>
    %33 = arith.addf %29, %32 : vector<8x128xf32>
    %cst_20 = arith.constant 0.000000e+00 : f32
    %34 = vector.broadcast %cst_20 : f32 to vector<8x128xf32>
    %35 = arith.maximumf %33, %34 : vector<8x128xf32>
    %c0_21 = arith.constant 0 : index
    %c0_22 = arith.constant 0 : index
    %c0_23 = arith.constant 0 : index
    %36 = vector.load %arg8[%c0_21, %c0_22, %c0_23] : memref<2x8x128xf32, #tpu.memory_space<vmem>>, vector<1x8x128xf32>
    %37 = vector.shape_cast %36 : vector<1x8x128xf32> to vector<8x128xf32>
    %38 = vector.shape_cast %35 : vector<8x128xf32> to vector<1x8x128xf32>
    tpu.vector_store %arg8[%c0_21, %c0_22, %c0_23], %38 {strides = array<i32>} : memref<2x8x128xf32, #tpu.memory_space<vmem>>, vector<1x8x128xf32>,
    %c1 = arith.constant 1 : index
    %c0_24 = arith.constant 0 : index
    %c0_25 = arith.constant 0 : index
    %39 = vector.load %arg1[%c1, %c0_24, %c0_25] : memref<2x8x128xf32, #tpu.memory_space<vmem>>, vector<1x8x128xf32>
    %40 = vector.shape_cast %39 : vector<1x8x128xf32> to vector<8x128xf32>
    %41 = tpu.concatenate %6, %40 in 1 : vector<8x4xf32>, vector<8x128xf32> -> vector<8x132xf32>
    %42 = vector.extract_strided_slice %41 {offsets = [0, 0], sizes = [8, 128], strides = [1, 1]} : vector<8x132xf32> to vector<8x128xf32>
    %43 = vector.extract_strided_slice %41 {offsets = [0, 2], sizes = [8, 128], strides = [1, 1]} : vector<8x132xf32> to vector<8x128xf32>
    %44 = vector.extract_strided_slice %41 {offsets = [0, 4], sizes = [8, 128], strides = [1, 1]} : vector<8x132xf32> to vector<8x128xf32>
    %45 = tpu.concatenate %42, %43, %44 in 0 : vector<8x128xf32>, vector<8x128xf32>, vector<8x128xf32> -> vector<24x128xf32>
    %cst_26 = arith.constant dense<0.000000e+00> : vector<8x128xf32>
    %46 = tpu.matmul %0, %45, %cst_26 {dimension_numbers = #tpu.dot_dimension_numbers<[1], [0], [0], [1], [0, 0, 1, 1], [], []>} : vector<8x24xf32>, vector<24x128xf32>, vector<8x128xf32> -> vector<8x128xf32>
    %47 = vector.broadcast %2 : vector<8x1xf32> to vector<8x128xf32>
    %48 = arith.addf %46, %47 : vector<8x128xf32>
    %cst_27 = arith.constant 0.000000e+00 : f32
    %49 = vector.broadcast %cst_27 : f32 to vector<8x128xf32>
    %50 = arith.maximumf %48, %49 : vector<8x128xf32>
    %51 = tpu.concatenate %7, %50 in 1 : vector<8x4xf32>, vector<8x128xf32> -> vector<8x132xf32>
    %52 = vector.extract_strided_slice %51 {offsets = [0, 0], sizes = [8, 128], strides = [1, 1]} : vector<8x132xf32> to vector<8x128xf32>
    %53 = vector.extract_strided_slice %51 {offsets = [0, 2], sizes = [8, 128], strides = [1, 1]} : vector<8x132xf32> to vector<8x128xf32>
    %54 = vector.extract_strided_slice %51 {offsets = [0, 4], sizes = [8, 128], strides = [1, 1]} : vector<8x132xf32> to vector<8x128xf32>
    %55 = tpu.concatenate %52, %53, %54 in 0 : vector<8x128xf32>, vector<8x128xf32>, vector<8x128xf32> -> vector<24x128xf32>
    %cst_28 = arith.constant dense<0.000000e+00> : vector<8x128xf32>
    %56 = tpu.matmul %1, %55, %cst_28 {dimension_numbers = #tpu.dot_dimension_numbers<[1], [0], [0], [1], [0, 0, 1, 1], [], []>} : vector<8x24xf32>, vector<24x128xf32>, vector<8x128xf32> -> vector<8x128xf32>
    %57 = vector.broadcast %3 : vector<8x1xf32> to vector<8x128xf32>
    %58 = arith.addf %56, %57 : vector<8x128xf32>
    %cst_29 = arith.constant 0.000000e+00 : f32
    %59 = vector.broadcast %cst_29 : f32 to vector<8x128xf32>
    %60 = arith.maximumf %58, %59 : vector<8x128xf32>
    %cst_30 = arith.constant dense<0.000000e+00> : vector<8x128xf32>
    %61 = tpu.matmul %4, %40, %cst_30 {dimension_numbers = #tpu.dot_dimension_numbers<[1], [0], [0], [1], [0, 0, 1, 1], [], []>} : vector<8x8xf32>, vector<8x128xf32>, vector<8x128xf32> -> vector<8x128xf32>
    %62 = vector.broadcast %5 : vector<8x1xf32> to vector<8x128xf32>
    %63 = arith.addf %61, %62 : vector<8x128xf32>
    %64 = arith.addf %60, %63 : vector<8x128xf32>
    %cst_31 = arith.constant 0.000000e+00 : f32
    %65 = vector.broadcast %cst_31 : f32 to vector<8x128xf32>
    %66 = arith.maximumf %64, %65 : vector<8x128xf32>
    %c1_32 = arith.constant 1 : index
    %c0_33 = arith.constant 0 : index
    %c0_34 = arith.constant 0 : index
    %67 = vector.load %arg8[%c1_32, %c0_33, %c0_34] : memref<2x8x128xf32, #tpu.memory_space<vmem>>, vector<1x8x128xf32>
    %68 = vector.shape_cast %67 : vector<1x8x128xf32> to vector<8x128xf32>
    %69 = vector.shape_cast %66 : vector<8x128xf32> to vector<1x8x128xf32>
    tpu.vector_store %arg8[%c1_32, %c0_33, %c0_34], %69 {strides = array<i32>} : memref<2x8x128xf32, #tpu.memory_space<vmem>>, vector<1x8x128xf32>,
    return
  }
  func.func @transform_0(%arg0: i32) -> (i32, i32, i32) {
    %c0_i32 = arith.constant 0 : i32
    %c0_i32_0 = arith.constant 0 : i32
    %c0_i32_1 = arith.constant 0 : i32
    return %arg0, %c0_i32, %c0_i32_0 : i32, i32, i32
  }
  func.func @transform_1(%arg0: i32) -> (i32, i32) {
    %c0_i32 = arith.constant 0 : i32
    %c0_i32_0 = arith.constant 0 : i32
    %c0_i32_1 = arith.constant 0 : i32
    return %c0_i32, %c0_i32_0 : i32, i32
  }
  func.func @transform_2(%arg0: i32) -> (i32, i32) {
    %c0_i32 = arith.constant 0 : i32
    %c0_i32_0 = arith.constant 0 : i32
    %c0_i32_1 = arith.constant 0 : i32
    return %c0_i32, %c0_i32_0 : i32, i32
  }
  func.func @transform_3(%arg0: i32) -> (i32, i32) {
    %c0_i32 = arith.constant 0 : i32
    %c0_i32_0 = arith.constant 0 : i32
    %c0_i32_1 = arith.constant 0 : i32
    return %c0_i32, %c0_i32_0 : i32, i32
  }
  func.func @transform_4(%arg0: i32) -> (i32, i32) {
    %c0_i32 = arith.constant 0 : i32
    %c0_i32_0 = arith.constant 0 : i32
    %c0_i32_1 = arith.constant 0 : i32
    return %c0_i32, %c0_i32_0 : i32, i32
  }
  func.func @transform_5(%arg0: i32) -> (i32, i32) {
    %c0_i32 = arith.constant 0 : i32
    %c0_i32_0 = arith.constant 0 : i32
    %c0_i32_1 = arith.constant 0 : i32
    return %c0_i32, %c0_i32_0 : i32, i32
  }
  func.func @transform_6(%arg0: i32) -> (i32, i32) {
    %c0_i32 = arith.constant 0 : i32
    %c0_i32_0 = arith.constant 0 : i32
    %c0_i32_1 = arith.constant 0 : i32
    return %c0_i32, %c0_i32_0 : i32, i32
  }
  func.func @transform_7(%arg0: i32) -> (i32, i32, i32) {
    %c0_i32 = arith.constant 0 : i32
    %c0_i32_0 = arith.constant 0 : i32
    %c0_i32_1 = arith.constant 0 : i32
    return %arg0, %c0_i32, %c0_i32_0 : i32, i32, i32
  }
}

</mosaic_0001>

<llo_original>
// kernel: tpu_custom_call.1
$region0: #{tpu_custom_call.1}
  #allocation0 [shape = 'u32[]', space=smem, size = 0x4, offset = 0x4, fixed_abs, tag = 'smem constant byte address 0x4 - core index']
  #allocation1 [shape = 'u32[72,128]{1,0:T(1,128)}', space=vmem, size = 0x9000, scoped, tag = 'internal scratch']
  %s0 = inlined_call_operand.hbm [shape: f32[4,8,128], index: 0, kind: input, shape index: {}]
  %s1 = inlined_call_operand.vmem [shape: f32[8,24], index: 1, kind: input, shape index: {}]
  %s2 = inlined_call_operand.vmem [shape: f32[8,1], index: 2, kind: input, shape index: {}]
  %s3 = inlined_call_operand.vmem [shape: f32[8,24], index: 3, kind: input, shape index: {}]
  %s4 = inlined_call_operand.vmem [shape: f32[8,1], index: 4, kind: input, shape index: {}]
  %s5 = inlined_call_operand.vmem [shape: f32[8,8], index: 5, kind: input, shape index: {}]
  %s6 = inlined_call_operand.vmem [shape: f32[8,1], index: 6, kind: input, shape index: {}]
  %s7 = inlined_call_operand.hbm [shape: f32[4,8,128], index: 7, kind: output, shape index: {}]
  %s8 = sld [smem:[#allocation0]]
  $region65: #{tpu_custom_call.1} parent=0
    _
  %s10 = ssub.s32 1, %s8
  %s11 = scalar_select 0, %s10, %s8
  $region1: #{tpu_custom_call.1} parent=0
    #allocation2 [shape = 'u8[16384]{0}', space=vmem, size = 0x4000, scoped, tag = 'input window, operand 0']
    #allocation3 [shape = 's32[2]{0}', space=sflag, size = 0x8, scoped, tag = 'scoped memory for tpu_custom_call.1']
    #allocation4 [shape = 's32[2]{0}', space=sflag, size = 0x8, scoped, tag = 'scoped memory for tpu_custom_call.1']
    #allocation5 [shape = 'u8[16384]{0}', space=vmem, size = 0x4000, scoped, tag = 'output window, operand 0']
    %12 = vsyncpa [#allocation3], 0
    %s13 = scalar_lea.sflag [#allocation3], 1
    %14 = vsyncpa %s13, 0
    %15 = vsyncpa [#allocation4], 0
    %s16 = scalar_lea.sflag [#allocation4], 1
    %17 = vsyncpa %s16, 0
    loop: start=0, step=1, limit=4
    $region2: #{tpu_custom_call.1} parent=1 // loop_pre_header
      _
    $region3: #{tpu_custom_call.1} parent=1 // loop_header
      %s19 = sphi 0, %s23
      %p20 = scmp.ge.s32.totalorder %s19, 4
      %s29 = sphi 0, %s31
      %s32 = sphi 0, %s29
      %s33 = sphi 0, %s32
      %s49 = sphi 0, %s33
      %s53 = sphi 0, %s53
      %s55 = sphi 0, %s53
      %s56 = sphi 0, %s55
      %s70 = sphi 0, %s56
      %s74 = sphi 0, %s74
      %s76 = sphi 0, %s74
      %s77 = sphi 0, %s76
      %s91 = sphi 0, %s77
      %s95 = sphi 0, %s95
      %s97 = sphi 0, %s95
      %s98 = sphi 0, %s97
      %s112 = sphi 0, %s98
      %s116 = sphi 0, %s116
      %s118 = sphi 0, %s116
      %s119 = sphi 0, %s118
      %s133 = sphi 0, %s119
      %s137 = sphi 0, %s137
      %s139 = sphi 0, %s137
      %s140 = sphi 0, %s139
      %s154 = sphi 0, %s140
      %s158 = sphi 0, %s158
      %s160 = sphi 0, %s158
      %s161 = sphi 0, %s160
      %s175 = sphi 0, %s161
      %s181 = sphi 0, %s183
      %s184 = sphi 0, %s181
      %s185 = sphi 0, %s184
      %s201 = sphi 0, %s185
    $region4: #{tpu_custom_call.1} parent=1 // loop_header_branch
      %22 = sbr.rel (%p20) target = $region8
    $region5: #{tpu_custom_call.1} parent=1 // loop_body
      %s24 = ssub.s32 %s19, 1
      %s25 = ssub.s32 %s19, 2
      %s26 = sadd.s32 %s19, 1
      %s27 = ssub.s32 %s19, %s26
      %p28 = scmp.eq.s32.totalorder %s27, 0
      %s30 = sadd.s32 %s29, 1
      %s31 = scalar_select %p28, %s29, %s30
      %p34 = pneg %p28
      %p35 = scmp.eq.s32.totalorder %s19, 1
      %p36 = por %p34, %p35
      %p37 = scmp.ne.s32.totalorder %s29, %s32
      %p38 = scmp.eq.s32.totalorder %s19, 0
      %p39 = por %p37, %p38
      %p40 = scmp.ne.s32.totalorder %s29, %s32
      %p41 = scmp.eq.s32.totalorder %s24, 1
      %p42 = por %p40, %p41
      %p43 = scmp.ne.s32.totalorder %s32, %s33
      %p44 = scmp.eq.s32.totalorder %s24, 0
      %p45 = por %p43, %p44
      %p46 = scmp.ne.s32.totalorder %s32, %s33
      %p47 = scmp.eq.s32.totalorder %s25, 1
      %p48 = por %p46, %p47
      %p50 = scmp.ne.s32.totalorder %s33, %s49
      %p51 = scmp.eq.s32.totalorder %s25, 0
      %p52 = por %p50, %p51
      %s54 = sadd.s32 %s53, 1
      %p57 = scmp.eq.s32.totalorder %s19, 1
      %p58 = scmp.ne.s32.totalorder %s53, %s55
      %p59 = scmp.eq.s32.totalorder %s19, 0
      %p60 = por %p58, %p59
      %p61 = scmp.ne.s32.totalorder %s53, %s55
      %p62 = scmp.eq.s32.totalorder %s24, 1
      %p63 = por %p61, %p62
      %p64 = scmp.ne.s32.totalorder %s55, %s56
      %p65 = scmp.eq.s32.totalorder %s24, 0
      %p66 = por %p64, %p65
      %p67 = scmp.ne.s32.totalorder %s55, %s56
      %p68 = scmp.eq.s32.totalorder %s25, 1
      %p69 = por %p67, %p68
      %p71 = scmp.ne.s32.totalorder %s56, %s70
      %p72 = scmp.eq.s32.totalorder %s25, 0
      %p73 = por %p71, %p72
      %s75 = sadd.s32 %s74, 1
      %p78 = scmp.eq.s32.totalorder %s19, 1
      %p79 = scmp.ne.s32.totalorder %s74, %s76
      %p80 = scmp.eq.s32.totalorder %s19, 0
      %p81 = por %p79, %p80
      %p82 = scmp.ne.s32.totalorder %s74, %s76
      %p83 = scmp.eq.s32.totalorder %s24, 1
      %p84 = por %p82, %p83
      %p85 = scmp.ne.s32.totalorder %s76, %s77
      %p86 = scmp.eq.s32.totalorder %s24, 0
      %p87 = por %p85, %p86
      %p88 = scmp.ne.s32.totalorder %s76, %s77
      %p89 = scmp.eq.s32.totalorder %s25, 1
      %p90 = por %p88, %p89
      %p92 = scmp.ne.s32.totalorder %s77, %s91
      %p93 = scmp.eq.s32.totalorder %s25, 0
      %p94 = por %p92, %p93
      %s96 = sadd.s32 %s95, 1
      %p99 = scmp.eq.s32.totalorder %s19, 1
      %p100 = scmp.ne.s32.totalorder %s95, %s97
      %p101 = scmp.eq.s32.totalorder %s19, 0
      %p102 = por %p100, %p101
      %p103 = scmp.ne.s32.totalorder %s95, %s97
      %p104 = scmp.eq.s32.totalorder %s24, 1
      %p105 = por %p103, %p104
      %p106 = scmp.ne.s32.totalorder %s97, %s98
      %p107 = scmp.eq.s32.totalorder %s24, 0
      %p108 = por %p106, %p107
      %p109 = scmp.ne.s32.totalorder %s97, %s98
      %p110 = scmp.eq.s32.totalorder %s25, 1
      %p111 = por %p109, %p110
      %p113 = scmp.ne.s32.totalorder %s98, %s112
      %p114 = scmp.eq.s32.totalorder %s25, 0
      %p115 = por %p113, %p114
      %s117 = sadd.s32 %s116, 1
      %p120 = scmp.eq.s32.totalorder %s19, 1
      %p121 = scmp.ne.s32.totalorder %s116, %s118
      %p122 = scmp.eq.s32.totalorder %s19, 0
      %p123 = por %p121, %p122
      %p124 = scmp.ne.s32.totalorder %s116, %s118
      %p125 = scmp.eq.s32.totalorder %s24, 1
      %p126 = por %p124, %p125
      %p127 = scmp.ne.s32.totalorder %s118, %s119
      %p128 = scmp.eq.s32.totalorder %s24, 0
      %p129 = por %p127, %p128
      %p130 = scmp.ne.s32.totalorder %s118, %s119
      %p131 = scmp.eq.s32.totalorder %s25, 1
      %p132 = por %p130, %p131
      %p134 = scmp.ne.s32.totalorder %s119, %s133
      %p135 = scmp.eq.s32.totalorder %s25, 0
      %p136 = por %p134, %p135
      %s138 = sadd.s32 %s137, 1
      %p141 = scmp.eq.s32.totalorder %s19, 1
      %p142 = scmp.ne.s32.totalorder %s137, %s139
      %p143 = scmp.eq.s32.totalorder %s19, 0
      %p144 = por %p142, %p143
      %p145 = scmp.ne.s32.totalorder %s137, %s139
      %p146 = scmp.eq.s32.totalorder %s24, 1
      %p147 = por %p145, %p146
      %p148 = scmp.ne.s32.totalorder %s139, %s140
      %p149 = scmp.eq.s32.totalorder %s24, 0
      %p150 = por %p148, %p149
      %p151 = scmp.ne.s32.totalorder %s139, %s140
      %p152 = scmp.eq.s32.totalorder %s25, 1
      %p153 = por %p151, %p152
      %p155 = scmp.ne.s32.totalorder %s140, %s154
      %p156 = scmp.eq.s32.totalorder %s25, 0
      %p157 = por %p155, %p156
      %s159 = sadd.s32 %s158, 1
      %p162 = scmp.eq.s32.totalorder %s19, 1
      %p163 = scmp.ne.s32.totalorder %s158, %s160
      %p164 = scmp.eq.s32.totalorder %s19, 0
      %p165 = por %p163, %p164
      %p166 = scmp.ne.s32.totalorder %s158, %s160
      %p167 = scmp.eq.s32.totalorder %s24, 1
      %p168 = por %p166, %p167
      %p169 = scmp.ne.s32.totalorder %s160, %s161
      %p170 = scmp.eq.s32.totalorder %s24, 0
      %p171 = por %p169, %p170
      %p172 = scmp.ne.s32.totalorder %s160, %s161
      %p173 = scmp.eq.s32.totalorder %s25, 1
      %p174 = por %p172, %p173
      %p176 = scmp.ne.s32.totalorder %s161, %s175
      %p177 = scmp.eq.s32.totalorder %s25, 0
      %p178 = por %p176, %p177
      %s179 = ssub.s32 %s19, %s26
      %p180 = scmp.eq.s32.totalorder %s179, 0
      %s182 = sadd.s32 %s181, 1
      %s183 = scalar_select %p180, %s181, %s182
      %p186 = pneg %p180
      %p187 = scmp.eq.s32.totalorder %s19, 1
      %p188 = por %p186, %p187
      %p189 = scmp.ne.s32.totalorder %s181, %s184
      %p190 = scmp.eq.s32.totalorder %s19, 0
      %p191 = por %p189, %p190
      %p192 = scmp.ne.s32.totalorder %s181, %s184
      %p193 = scmp.eq.s32.totalorder %s24, 1
      %p194 = por %p192, %p193
      %p195 = scmp.ne.s32.totalorder %s184, %s185
      %p196 = scmp.eq.s32.totalorder %s24, 0
      %p197 = por %p195, %p196
      %p198 = scmp.ne.s32.totalorder %s184, %s185
      %p199 = scmp.eq.s32.totalorder %s25, 1
      %p200 = por %p198, %p199
      %p202 = scmp.ne.s32.totalorder %s185, %s201
      %p203 = scmp.eq.s32.totalorder %s25, 0
      %p204 = por %p202, %p203
      %p205 = scmp.le.s32.totalorder 1, %s19
      %p206 = scmp.lt.s32.totalorder %s19, 3
      %p207 = pnand %p205, %p206
      %p208 = pneg %p207
      // Predicated region
      $region9: #{tpu_custom_call.1} parent=5 // pred_check
        _
      $region10: #{tpu_custom_call.1} parent=5 // pred_check_branch
        %210 = sbr.rel (%p207) target = $region12
      $region11: #{tpu_custom_call.1} parent=5 // pred_region
        %s211 = ssub.s32 %s19, 1
        // Predicated region
        $region13: #{tpu_custom_call.1} parent=11 // pred_check
          %p212 = pneg %p66
        $region14: #{tpu_custom_call.1} parent=11 // pred_check_branch
          %214 = sbr.rel (%p212) target = $region16
        $region15: #{tpu_custom_call.1} parent=11 // pred_region
          _
        $region16: #{tpu_custom_call.1} parent=11 // pred_fallthru
          _
        // Predicated region
        $region17: #{tpu_custom_call.1} parent=11 // pred_check
          %p215 = pneg %p87
        $region18: #{tpu_custom_call.1} parent=11 // pred_check_branch
          %217 = sbr.rel (%p215) target = $region20
        $region19: #{tpu_custom_call.1} parent=11 // pred_region
          _
        $region20: #{tpu_custom_call.1} parent=11 // pred_fallthru
          _
        // Predicated region
        $region21: #{tpu_custom_call.1} parent=11 // pred_check
          %p218 = pneg %p108
        $region22: #{tpu_custom_call.1} parent=11 // pred_check_branch
          %220 = sbr.rel (%p218) target = $region24
        $region23: #{tpu_custom_call.1} parent=11 // pred_region
          _
        $region24: #{tpu_custom_call.1} parent=11 // pred_fallthru
          _
        // Predicated region
        $region25: #{tpu_custom_call.1} parent=11 // pred_check
          %p221 = pneg %p129
        $region26: #{tpu_custom_call.1} parent=11 // pred_check_branch
          %223 = sbr.rel (%p221) target = $region28
        $region27: #{tpu_custom_call.1} parent=11 // pred_region
          _
        $region28: #{tpu_custom_call.1} parent=11 // pred_fallthru
          _
        // Predicated region
        $region29: #{tpu_custom_call.1} parent=11 // pred_check
          %p224 = pneg %p150
        $region30: #{tpu_custom_call.1} parent=11 // pred_check_branch
          %226 = sbr.rel (%p224) target = $region32
        $region31: #{tpu_custom_call.1} parent=11 // pred_region
          _
        $region32: #{tpu_custom_call.1} parent=11 // pred_fallthru
          _
        // Predicated region
        $region33: #{tpu_custom_call.1} parent=11 // pred_check
          %p227 = pneg %p171
        $region34: #{tpu_custom_call.1} parent=11 // pred_check_branch
          %229 = sbr.rel (%p227) target = $region36
        $region35: #{tpu_custom_call.1} parent=11 // pred_region
          _
        $region36: #{tpu_custom_call.1} parent=11 // pred_fallthru
          _
      $region12: #{tpu_custom_call.1} parent=5 // pred_fallthru
        _
      %p230 = scmp.lt.s32.totalorder %s19, 2
      // Predicated region
      $region37: #{tpu_custom_call.1} parent=5 // pred_check
        %p231 = pneg %p230
      $region38: #{tpu_custom_call.1} parent=5 // pred_check_branch
        %233 = sbr.rel (%p231) target = $region40
      $region39: #{tpu_custom_call.1} parent=5 // pred_region
        // Predicated region
        $region41: #{tpu_custom_call.1} parent=39 // pred_check
          %p234 = pneg %p39
        $region42: #{tpu_custom_call.1} parent=39 // pred_check_branch
          %236 = sbr.rel (%p234) target = $region44
        $region43: #{tpu_custom_call.1} parent=39 // pred_region
          %s237 = sand.u32 %s29, 1
          %s238 = scalar_lea.sflag [#allocation3], %s237
          %s239 = sand.u32 %s29, 1
          %s240 = smul.addr %s239, 16
          %s241 = scalar_lea.vmem [#allocation2], %s240
          %s242 = smul.u32 2, %s19
          %244 = vsyncadd %s238, 0
          %s245 = smul.addr %s242, 8
          %s246 = scalar_lea.hbm %s0, %s245
          %s247 = sshll.u32 %s246, 4
          %s248 = int_to_ptr.hbm [resolvable:$true] %s247
          %s249 = sshll.u32 %s241, 4
          %s250 = int_to_ptr.vmem [resolvable:$true] %s249
          %255 = dma.hbm_to_vmem [thread:$0]  %s248, 256, %s250, %s238, 128, 128, 8
        $region44: #{tpu_custom_call.1} parent=39 // pred_fallthru
          _
      $region40: #{tpu_custom_call.1} parent=5 // pred_fallthru
        _
      %p256 = scmp.le.s32.totalorder 1, %s19
      %p257 = scmp.lt.s32.totalorder %s19, 3
      %p258 = pnand %p256, %p257
      %p259 = pneg %p258
      // Predicated region
      $region45: #{tpu_custom_call.1} parent=5 // pred_check
        _
      $region46: #{tpu_custom_call.1} parent=5 // pred_check_branch
        %261 = sbr.rel (%p258) target = $region48
      $region47: #{tpu_custom_call.1} parent=5 // pred_region
        %s262 = ssub.s32 %s19, 1
        %s263 = sand.u32 %s32, 1
        %s264 = scalar_lea.sflag [#allocation3], %s263
        %s265 = sand.u32 %s32, 1
        %s266 = smul.addr %s265, 16
        %s267 = scalar_lea.vmem [#allocation2], %s266
        // Predicated region
        $region49: #{tpu_custom_call.1} parent=47 // pred_check
          %p268 = pneg %p45
        $region50: #{tpu_custom_call.1} parent=47 // pred_check_branch
          %270 = sbr.rel (%p268) target = $region52
        $region51: #{tpu_custom_call.1} parent=47 // pred_region
          %272 = dma.done %s264, 256
        $region52: #{tpu_custom_call.1} parent=47 // pred_fallthru
          _
        %s273 = sand.u32 %s32, 1
        %s274 = scalar_lea.sflag [#allocation3], %s273
        %s275 = sand.u32 %s32, 1
        %s276 = smul.addr %s275, 16
        %s277 = scalar_lea.vmem [#allocation2], %s276
        %p278 = pneg %p45
        %p279 = pneg %p42
        %p280 = pneg %p66
        %p281 = pneg %p63
        %p282 = pneg %p87
        %p283 = pneg %p84
        %p284 = pneg %p108
        %p285 = pneg %p105
        %p286 = pneg %p129
        %p287 = pneg %p126
        %p288 = pneg %p150
        %p289 = pneg %p147
        %p290 = pneg %p171
        %p291 = pneg %p168
        %p292 = pneg %p197
        %p293 = pneg %p194
        %s294 = sand.u32 %s184, 1
        %s295 = scalar_lea.sflag [#allocation4], %s294
        %s296 = sand.u32 %s184, 1
        %s297 = smul.addr %s296, 16
        %s298 = scalar_lea.vmem [#allocation5], %s297
        %s299 = smul.u32 2, %s24
        %s300 = smul.u32 2, %s24
        %v301 = vld [vmem:[%s1] sm:$0xff]
        %v302 = vld [vmem:[%s3] sm:$0xff]
        %v303 = vld [vmem:[%s2] sm:$0xff]
        %v304 = vld [vmem:[%s4] sm:$0xff]
        %v305 = vld [vmem:[%s5] sm:$0xff]
        %v306 = vld [vmem:[%s6] sm:$0xff]
        %v307 = vld [vmem:[%s267] sm:$0xff]
        %309 = vrot.lane.b32.xlu0 %v307, 4
        %v310 = vpop.permute.xlu0 %309
        %vm312 = vcmask 31744
        %v313 = vsel %vm312, 0.0, %v310
        %315 = vrot.lane.b32.xlu0 %v313, 126
        %v316 = vpop.permute.xlu0 %315
        %317 = vrot.lane.b32.xlu0 %v310, 126
        %v318 = vpop.permute.xlu0 %317
        %vm319 = vcmask 1031168
        %v320 = vsel %vm319, %v316, %v318
        %322 = vrot.lane.b32.xlu0 %v313, 124
        %v323 = vpop.permute.xlu0 %322
        %324 = vrot.lane.b32.xlu0 %v310, 124
        %v325 = vpop.permute.xlu0 %324
        %vm326 = vcmask 1014784
        %v327 = vsel %vm326, %v323, %v325
        %330 = vset.pattern.permute.xlu0 0
        %331 = vperm.xlu0 %330, %v303
        %v332 = vpop.permute.xlu0 %331
        %vm334 = vcmask 195584
        %v336 = vsel %vm334, %v301, 0
        %338 = vmatpush.msra.mxu0 0.0
        %339 = vmatpush.msra.mxu0 0.0
        %340 = vmatpush.msra.mxu0 0.0
        %341 = vmatpush.msra.mxu0 0.0
        %342 = vmatpush.msra.mxu0 0.0
        %343 = vmatpush.msra.mxu0 0.0
        %344 = vmatpush.msra.mxu0 0.0
        %345 = vmatpush.msra.mxu0 0.0
        %346 = vmatpush.msra.mxu0 0.0
        %347 = vmatpush.msra.mxu0 0.0
        %348 = vmatpush.msra.mxu0 0.0
        %349 = vmatpush.msra.mxu0 0.0
        %350 = vmatpush.msra.mxu0 0.0
        %351 = vmatpush.msra.mxu0 %v327
        %352 = vmatpush.msra.mxu0 %v320
        %353 = vmatpush.msra.mxu0 %v313
        %354 = vmatmul.f32.gmra.mxu0 %v336
        %v355 = vpop.f32.mrf.mxu0
        %v356 = vadd.f32 %v332, %v355
        %357 = vdwg.mxu0
        %v358 = vmax.f32 %v356, 0.0
        %360 = vrot.lane.b32.xlu0 %v358, 4
        %v361 = vpop.permute.xlu0 %360
        %v363 = vsel %vm312, 0.0, %v361
        %365 = vrot.lane.b32.xlu0 %v363, 126
        %v366 = vpop.permute.xlu0 %365
        %367 = vrot.lane.b32.xlu0 %v361, 126
        %v368 = vpop.permute.xlu0 %367
        %v369 = vsel %vm319, %v366, %v368
        %371 = vrot.lane.b32.xlu0 %v363, 124
        %v372 = vpop.permute.xlu0 %371
        %373 = vrot.lane.b32.xlu0 %v361, 124
        %v374 = vpop.permute.xlu0 %373
        %v375 = vsel %vm326, %v372, %v374
        %378 = vset.pattern.permute.xlu0 0
        %379 = vperm.xlu0 %378, %v304
        %v380 = vpop.permute.xlu0 %379
        %v383 = vsel %vm334, %v302, 0
        %385 = vmatpush.msra.mxu0 0.0
        %386 = vmatpush.msra.mxu0 0.0
        %387 = vmatpush.msra.mxu0 0.0
        %388 = vmatpush.msra.mxu0 0.0
        %389 = vmatpush.msra.mxu0 0.0
        %390 = vmatpush.msra.mxu0 0.0
        %391 = vmatpush.msra.mxu0 0.0
        %392 = vmatpush.msra.mxu0 0.0
        %393 = vmatpush.msra.mxu0 0.0
        %394 = vmatpush.msra.mxu0 0.0
        %395 = vmatpush.msra.mxu0 0.0
        %396 = vmatpush.msra.mxu0 0.0
        %397 = vmatpush.msra.mxu0 0.0
        %398 = vmatpush.msra.mxu0 %v375
        %399 = vmatpush.msra.mxu0 %v369
        %400 = vmatpush.msra.mxu0 %v363
        %401 = vmatmul.f32.gmra.mxu0 %v383
        %v402 = vpop.f32.mrf.mxu0
        %v403 = vadd.f32 %v380, %v402
        %404 = vdwg.mxu0
        %v405 = vmax.f32 %v403, 0.0
        %407 = vset.pattern.permute.xlu0 0
        %408 = vperm.xlu0 %407, %v306
        %v409 = vpop.permute.xlu0 %408
        %vm411 = vcmask 64512
        %v413 = vsel %vm411, %v305, 0
        %415 = vmatpush.msra.mxu0 0.0
        %416 = vmatpush.msra.mxu0 0.0
        %417 = vmatpush.msra.mxu0 0.0
        %418 = vmatpush.msra.mxu0 0.0
        %419 = vmatpush.msra.mxu0 0.0
        %420 = vmatpush.msra.mxu0 0.0
        %421 = vmatpush.msra.mxu0 0.0
        %422 = vmatpush.msra.mxu0 0.0
        %423 = vmatpush.msra.mxu0 0.0
        %424 = vmatpush.msra.mxu0 0.0
        %425 = vmatpush.msra.mxu0 0.0
        %426 = vmatpush.msra.mxu0 0.0
        %427 = vmatpush.msra.mxu0 0.0
        %428 = vmatpush.msra.mxu0 0.0
        %429 = vmatpush.msra.mxu0 0.0
        %430 = vmatpush.msra.mxu0 %v307
        %431 = vmatmul.f32.gmra.mxu0 %v413
        %v432 = vpop.f32.mrf.mxu0
        %v433 = vadd.f32 %v409, %v432
        %434 = vdwg.mxu0
        %v435 = vadd.f32 %v405, %v433
        %v436 = vmax.f32 %v435, 0.0
        %437 = vst [vmem:[%s298] sm:$0xff] %v436
        %s438 = scalar_lea.vmem %s267, 8 [#allocation2]
        %v439 = vld [vmem:[%s438] sm:$0xff]
        %441 = vrot.lane.b32.xlu0 %v439, 4
        %v442 = vpop.permute.xlu0 %441
        %v444 = vsel %vm312, 0.0, %v442
        %446 = vrot.lane.b32.xlu0 %v444, 126
        %v447 = vpop.permute.xlu0 %446
        %448 = vrot.lane.b32.xlu0 %v442, 126
        %v449 = vpop.permute.xlu0 %448
        %v450 = vsel %vm319, %v447, %v449
        %452 = vrot.lane.b32.xlu0 %v444, 124
        %v453 = vpop.permute.xlu0 %452
        %454 = vrot.lane.b32.xlu0 %v442, 124
        %v455 = vpop.permute.xlu0 %454
        %v456 = vsel %vm326, %v453, %v455
        %458 = vmatpush.msra.mxu0 0.0
        %459 = vmatpush.msra.mxu0 0.0
        %460 = vmatpush.msra.mxu0 0.0
        %461 = vmatpush.msra.mxu0 0.0
        %462 = vmatpush.msra.mxu0 0.0
        %463 = vmatpush.msra.mxu0 0.0
        %464 = vmatpush.msra.mxu0 0.0
        %465 = vmatpush.msra.mxu0 0.0
        %466 = vmatpush.msra.mxu0 0.0
        %467 = vmatpush.msra.mxu0 0.0
        %468 = vmatpush.msra.mxu0 0.0
        %469 = vmatpush.msra.mxu0 0.0
        %470 = vmatpush.msra.mxu0 0.0
        %471 = vmatpush.msra.mxu0 %v456
        %472 = vmatpush.msra.mxu0 %v450
        %473 = vmatpush.msra.mxu0 %v444
        %474 = vmatmul.f32.gmra.mxu0 %v336
        %v475 = vpop.f32.mrf.mxu0
        %v476 = vadd.f32 %v332, %v475
        %477 = vdwg.mxu0
        %v478 = vmax.f32 %v476, 0.0
        %480 = vrot.lane.b32.xlu0 %v478, 4
        %v481 = vpop.permute.xlu0 %480
        %v483 = vsel %vm312, 0.0, %v481
        %485 = vrot.lane.b32.xlu0 %v483, 126
        %v486 = vpop.permute.xlu0 %485
        %487 = vrot.lane.b32.xlu0 %v481, 126
        %v488 = vpop.permute.xlu0 %487
        %v489 = vsel %vm319, %v486, %v488
        %491 = vrot.lane.b32.xlu0 %v483, 124
        %v492 = vpop.permute.xlu0 %491
        %493 = vrot.lane.b32.xlu0 %v481, 124
        %v494 = vpop.permute.xlu0 %493
        %v495 = vsel %vm326, %v492, %v494
        %497 = vmatpush.msra.mxu0 0.0
        %498 = vmatpush.msra.mxu0 0.0
        %499 = vmatpush.msra.mxu0 0.0
        %500 = vmatpush.msra.mxu0 0.0
        %501 = vmatpush.msra.mxu0 0.0
        %502 = vmatpush.msra.mxu0 0.0
        %503 = vmatpush.msra.mxu0 0.0
        %504 = vmatpush.msra.mxu0 0.0
        %505 = vmatpush.msra.mxu0 0.0
        %506 = vmatpush.msra.mxu0 0.0
        %507 = vmatpush.msra.mxu0 0.0
        %508 = vmatpush.msra.mxu0 0.0
        %509 = vmatpush.msra.mxu0 0.0
        %510 = vmatpush.msra.mxu0 %v495
        %511 = vmatpush.msra.mxu0 %v489
        %512 = vmatpush.msra.mxu0 %v483
        %513 = vmatmul.f32.gmra.mxu0 %v383
        %v514 = vpop.f32.mrf.mxu0
        %v515 = vadd.f32 %v380, %v514
        %516 = vdwg.mxu0
        %v517 = vmax.f32 %v515, 0.0
        %518 = vmatpush.msra.mxu0 0.0
        %519 = vmatpush.msra.mxu0 0.0
        %520 = vmatpush.msra.mxu0 0.0
        %521 = vmatpush.msra.mxu0 0.0
        %522 = vmatpush.msra.mxu0 0.0
        %523 = vmatpush.msra.mxu0 0.0
        %524 = vmatpush.msra.mxu0 0.0
        %525 = vmatpush.msra.mxu0 0.0
        %526 = vmatpush.msra.mxu0 0.0
        %527 = vmatpush.msra.mxu0 0.0
        %528 = vmatpush.msra.mxu0 0.0
        %529 = vmatpush.msra.mxu0 0.0
        %530 = vmatpush.msra.mxu0 0.0
        %531 = vmatpush.msra.mxu0 0.0
        %532 = vmatpush.msra.mxu0 0.0
        %533 = vmatpush.msra.mxu0 %v439
        %534 = vmatmul.f32.gmra.mxu0 %v413
        %v535 = vpop.f32.mrf.mxu0
        %v536 = vadd.f32 %v409, %v535
        %537 = vdwg.mxu0
        %v538 = vadd.f32 %v517, %v536
        %v539 = vmax.f32 %v538, 0.0
        %s540 = scalar_lea.vmem %s298, 8 [#allocation5]
        %541 = vst [vmem:[%s540] sm:$0xff] %v539
        %s542 = sand.u32 %s184, 1
        %s543 = scalar_lea.sflag [#allocation4], %s542
        %s544 = sand.u32 %s184, 1
        %s545 = smul.addr %s544, 16
        %s546 = scalar_lea.vmem [#allocation5], %s545
        // Predicated region
        $region53: #{tpu_custom_call.1} parent=47 // pred_check
          %p547 = pneg %p194
        $region54: #{tpu_custom_call.1} parent=47 // pred_check_branch
          %549 = sbr.rel (%p547) target = $region56
        $region55: #{tpu_custom_call.1} parent=47 // pred_region
          %s550 = smul.u32 2, %s24
          %552 = vsyncadd %s543, 0
          %s553 = smul.addr %s550, 8
          %s554 = scalar_lea.hbm %s7, %s553
          %s555 = sshll.u32 %s546, 4
          %s556 = int_to_ptr.vmem [resolvable:$true] %s555
          %s557 = sshll.u32 %s554, 4
          %s558 = int_to_ptr.hbm [resolvable:$true] %s557
          %563 = dma.vmem_to_hbm [thread:$0]  %s556, 256, %s558, %s543, 128, 128, 8
        $region56: #{tpu_custom_call.1} parent=47 // pred_fallthru
          _
      $region48: #{tpu_custom_call.1} parent=5 // pred_fallthru
        _
      %p564 = scmp.le.s32.totalorder 2, %s19
      // Predicated region
      $region57: #{tpu_custom_call.1} parent=5 // pred_check
        %p565 = pneg %p564
      $region58: #{tpu_custom_call.1} parent=5 // pred_check_branch
        %567 = sbr.rel (%p565) target = $region60
      $region59: #{tpu_custom_call.1} parent=5 // pred_region
        %s568 = ssub.s32 %s19, 2
        // Predicated region
        $region61: #{tpu_custom_call.1} parent=59 // pred_check
          %p569 = pneg %p200
        $region62: #{tpu_custom_call.1} parent=59 // pred_check_branch
          %571 = sbr.rel (%p569) target = $region64
        $region63: #{tpu_custom_call.1} parent=59 // pred_region
          %s572 = sand.u32 %s185, 1
          %s573 = scalar_lea.sflag [#allocation4], %s572
          %s574 = sand.u32 %s185, 1
          %s575 = smul.addr %s574, 16
          %s576 = scalar_lea.vmem [#allocation5], %s575
          %578 = dma.done %s573, 256
        $region64: #{tpu_custom_call.1} parent=59 // pred_fallthru
          _
      $region60: #{tpu_custom_call.1} parent=5 // pred_fallthru
        _
    $region6: #{tpu_custom_call.1} parent=1 // loop_footer
      %s23 = sadd.s32 1, %s19
    $region7: #{tpu_custom_call.1} parent=1 // loop_footer_branch
      %18 = sbr.rel target = $region3
    $region8: #{tpu_custom_call.1} parent=1 // loop_exit
      _
    %579 = vsyncpa [#allocation3], 1
    %s580 = scalar_lea.sflag [#allocation3], 1
    %581 = vsyncpa %s580, 1
    %582 = vsyncpa [#allocation4], 1
    %s583 = scalar_lea.sflag [#allocation4], 1
    %584 = vsyncpa %s583, 1

</llo_original>
